<compile_context>
chip_gen: v5e
topology: v5e:2x2
jax: 0.10.0
libtpu: 0.0.40
codegen_flags: <defaults>
</compile_context>

<pallas_src>
import functools

import jax
import jax.numpy as jnp
from jax.experimental import pallas as pl
from jax.experimental.pallas import tpu as pltpu


def _round_up(n, m):
    return ((n + m - 1) // m) * m


def _mlp_softmax_kernel(x_ref, w1b1_ref, w2b2_ref, o_ref, *, f_in):
    x = x_ref[...]                       # (TB, F_in)
    w1b1 = w1b1_ref[...]                 # (F_in + 1, H_pad)  last row = b1 (+1.0 bias lane)
    w2b2 = w2b2_ref[...]                 # (H_pad, O_pad)     bias-lane row = b2 / -1e30 pad

    # Layer 1 on the VPU: K == f_in is degenerate (2 for MountainCar); an MXU
    # matmul would pad K up to 128/256 and pay fill/drain for ~1% useful work.
    h = w1b1[f_in:f_in + 1, :]           # bias row, (1, H_pad); bias lane holds 1.0
    for k in range(f_in):                # static unroll
        h = h + x[:, k:k + 1] * w1b1[k:k + 1, :]
    h = jnp.maximum(h, 0.0)              # (TB, H_pad); bias lane stays exactly 1.0

    # Layer 2 on the MXU: native K = 128 contraction, b2 folded in via the
    # constant-1.0 bias lane of h, padded output lanes driven to ~-1e30.
    logits = jnp.dot(h, w2b2, preferred_element_type=jnp.float32)

    # Numerically stable softmax along the action (lane) axis.
    m = jnp.max(logits, axis=1, keepdims=True)
    e = jnp.exp(logits - m)              # padded lanes underflow to 0
    s = jnp.sum(e, axis=1, keepdims=True)
    o_ref[...] = (e * pl.reciprocal(s, approx=False)).astype(o_ref.dtype)


@functools.partial(jax.jit, static_argnames=("out_size", "block_batch"))
def function_approximator_forward(x, w1b1, w2b2, *, out_size, block_batch=1024):
    """x: (B, F_in); w1b1: (F_in+1, H_pad); w2b2: (H_pad, O_pad). Returns (B, out_size)."""
    b, f_in = x.shape
    o_pad = w2b2.shape[1]

    # Grid sizing: derive the step count first so the padding tracks B, not the
    # tile size.  Small rollouts -> one grid step (per-step overhead ~0.35 us
    # dominates sub-us compute); long rollouts -> minimal number of ~block_batch
    # "parallel" steps so v7x's two TensorCores each get a non-trivial tile.
    g = pl.cdiv(b, block_batch)
    tb = _round_up(pl.cdiv(b, g), 8)     # batch tile, multiple of 8
    b_pad = g * tb
    if b_pad != b:
        x = jnp.pad(x, ((0, b_pad - b), (0, 0)))  # zero rows -> finite softmax, discarded below

    out = pl.pallas_call(
        functools.partial(_mlp_softmax_kernel, f_in=f_in),
        out_shape=jax.ShapeDtypeStruct((b_pad, o_pad), jnp.float32),
        grid=(g,),
        in_specs=[
            pl.BlockSpec((tb, f_in), lambda i: (i, 0)),    # streamed states
            pl.BlockSpec(w1b1.shape, lambda i: (0, 0)),    # VMEM-resident packed weights
            pl.BlockSpec(w2b2.shape, lambda i: (0, 0)),    # VMEM-resident packed weights
        ],
        out_specs=pl.BlockSpec((tb, o_pad), lambda i: (i, 0)),
        compiler_params=pltpu.CompilerParams(
            dimension_semantics=("parallel",)),
    )(x, w1b1, w2b2)
    return out[:b, :out_size]


def init_params(key, features_in_cnt, hidden_layer_size, output_size):
    """torch.nn.Linear-style init: U[-1/sqrt(fan_in), 1/sqrt(fan_in)]."""
    k1, k2, k3, k4 = jax.random.split(key, 4)
    bound1 = 1.0 / jnp.sqrt(features_in_cnt)
    bound2 = 1.0 / jnp.sqrt(hidden_layer_size)
    # Stored as (in, out) == transpose of PyTorch's (out, in) weight layout.
    w1 = jax.random.uniform(k1, (features_in_cnt, hidden_layer_size),
                            jnp.float32, -bound1, bound1)
    b1 = jax.random.uniform(k2, (hidden_layer_size,), jnp.float32, -bound1, bound1)
    w2 = jax.random.uniform(k3, (hidden_layer_size, output_size),
                            jnp.float32, -bound2, bound2)
    b2 = jax.random.uniform(k4, (output_size,), jnp.float32, -bound2, bound2)
    return w1, b1, w2, b2


def pack_params(w1, b1, w2, b2, *, hidden_pad=128, lane_pad=128):
    """Pack params into 2 lane-aligned buffers.

    w1b1: (F_in+1, H_pad) -- last row is b1; one padded hidden lane ('bias
          lane') has b1 = 1.0 and zero w1, so ReLU passes a constant 1.0 into
          the layer-2 contraction.
    w2b2: (H_pad, O_pad)  -- the bias-lane row carries b2 on the real action
          lanes and -1e30 on the padded lanes (softmax mass ~0).

    NOTE: the -1e30 padded-logit trick relies on f32/bf16 exponent range; do
    not switch the logits to fp16, and never reduce over padded lanes with
    anything other than max/exp/sum-of-exp.
    """
    f_in, hidden = w1.shape
    out = w2.shape[1]
    h_pad = _round_up(max(hidden + 1, hidden_pad), 128)   # +1 guarantees a free bias lane
    o_pad = _round_up(max(out, lane_pad), 128)
    bias_lane = hidden                                    # first padded hidden lane

    w1b1 = jnp.zeros((f_in + 1, h_pad), jnp.float32)
    w1b1 = w1b1.at[:f_in, :hidden].set(w1.astype(jnp.float32))
    w1b1 = w1b1.at[f_in, :hidden].set(b1.astype(jnp.float32))
    w1b1 = w1b1.at[f_in, bias_lane].set(1.0)

    w2b2 = jnp.zeros((h_pad, o_pad), jnp.float32)
    w2b2 = w2b2.at[:hidden, :out].set(w2.astype(jnp.float32))
    w2b2 = w2b2.at[bias_lane, :].set(-1e30)
    w2b2 = w2b2.at[bias_lane, :out].set(b2.astype(jnp.float32))
    return w1b1, w2b2


def _reference(x, w1, b1, w2, b2):
    h = jnp.maximum(x @ w1 + b1, 0.0)
    return jax.nn.softmax(h @ w2 + b2, axis=1)


if __name__ == "__main__":
    # MountainCar: 2 state features, 3 discrete actions.
    features_in_cnt = 2
    hidden_layer_size = 32
    output_size = 3

    key = jax.random.PRNGKey(0)
    k_x1, k_x2, k_p = jax.random.split(key, 3)
    w1, b1, w2, b2 = init_params(k_p, features_in_cnt, hidden_layer_size, output_size)
    w1b1, w2b2 = pack_params(w1, b1, w2, b2)

    # Case 1: small rollout (B=300) -> single grid step, 300 -> 304 pad only.
    x1 = jax.random.normal(k_x1, (300, features_in_cnt), dtype=jnp.float32)
    probs1 = jax.block_until_ready(
        function_approximator_forward(x1, w1b1, w2b2, out_size=output_size))
    ref1 = _reference(x1, w1, b1, w2, b2)
    assert probs1.shape == (300, output_size)
    assert jnp.allclose(probs1, ref1, atol=1e-4), "mismatch vs reference (B=300)"
    assert jnp.allclose(jnp.sum(probs1, axis=1), 1.0, atol=1e-4)

    # Case 2: longer rollout (B=2500) -> multi-step "parallel" grid path.
    x2 = jax.random.normal(k_x2, (2500, features_in_cnt), dtype=jnp.float32)
    probs2 = jax.block_until_ready(
        function_approximator_forward(x2, w1b1, w2b2, out_size=output_size))
    ref2 = _reference(x2, w1, b1, w2, b2)
    assert probs2.shape == (2500, output_size)
    assert jnp.allclose(probs2, ref2, atol=1e-4), "mismatch vs reference (B=2500)"
    assert jnp.allclose(jnp.sum(probs2, axis=1), 1.0, atol=1e-4)

    # TODO(synk): get_action's Categorical sampling / log_prob is host-side in
    # the PyTorch module; fusing it in-kernel (pltpu.prng_seed +
    # pltpu.prng_random_bits, emitting int32 action + f32 log-prob) would cut
    # output writeback ~64x for production rollouts.

    print("KERNEL_OK")
</pallas_src>

<mosaic_0001>
module attributes {stable_mosaic.version = 11 : i64} {
  func.func @_mlp_softmax_kernel(%arg0: i32, %arg1: memref<304x2xf32, #tpu.memory_space<vmem>>, %arg2: memref<3x128xf32, #tpu.memory_space<vmem>>, %arg3: memref<128x128xf32, #tpu.memory_space<vmem>>, %arg4: memref<304x128xf32, #tpu.memory_space<vmem>>) attributes {dimension_semantics = [#tpu.dimension_semantics<parallel>], iteration_bounds = array<i64: 1>, scalar_prefetch = 0 : i64, scratch_operands = 0 : i64, tpu.core_type = #tpu.core_type<tc>, window_params = [{transform_indices = @transform_0, window_bounds = array<i64: 304, 2>}, {pipeline_mode = #tpu.pipeline_mode<synchronous>, transform_indices = @transform_1, window_bounds = array<i64: 3, 128>}, {pipeline_mode = #tpu.pipeline_mode<synchronous>, transform_indices = @transform_2, window_bounds = array<i64: 128, 128>}, {transform_indices = @transform_3, window_bounds = array<i64: 304, 128>}]} {
    %c0 = arith.constant 0 : index
    %c0_0 = arith.constant 0 : index
    %0 = vector.load %arg1[%c0, %c0_0] : memref<304x2xf32, #tpu.memory_space<vmem>>, vector<304x2xf32>
    %c0_1 = arith.constant 0 : index
    %c0_2 = arith.constant 0 : index
    %1 = vector.load %arg2[%c0_1, %c0_2] : memref<3x128xf32, #tpu.memory_space<vmem>>, vector<3x128xf32>
    %c0_3 = arith.constant 0 : index
    %c0_4 = arith.constant 0 : index
    %2 = vector.load %arg3[%c0_3, %c0_4] : memref<128x128xf32, #tpu.memory_space<vmem>>, vector<128x128xf32>
    %3 = vector.extract_strided_slice %1 {offsets = [2, 0], sizes = [1, 128], strides = [1, 1]} : vector<3x128xf32> to vector<1x128xf32>
    %4 = vector.extract_strided_slice %0 {offsets = [0, 0], sizes = [304, 1], strides = [1, 1]} : vector<304x2xf32> to vector<304x1xf32>
    %5 = vector.extract_strided_slice %1 {offsets = [0, 0], sizes = [1, 128], strides = [1, 1]} : vector<3x128xf32> to vector<1x128xf32>
    %6 = vector.broadcast %4 : vector<304x1xf32> to vector<304x128xf32>
    %7 = vector.broadcast %5 : vector<1x128xf32> to vector<304x128xf32>
    %8 = arith.mulf %6, %7 : vector<304x128xf32>
    %9 = vector.broadcast %3 : vector<1x128xf32> to vector<304x128xf32>
    %10 = arith.addf %9, %8 : vector<304x128xf32>
    %11 = vector.extract_strided_slice %0 {offsets = [0, 1], sizes = [304, 1], strides = [1, 1]} : vector<304x2xf32> to vector<304x1xf32>
    %12 = vector.extract_strided_slice %1 {offsets = [1, 0], sizes = [1, 128], strides = [1, 1]} : vector<3x128xf32> to vector<1x128xf32>
    %13 = vector.broadcast %11 : vector<304x1xf32> to vector<304x128xf32>
    %14 = vector.broadcast %12 : vector<1x128xf32> to vector<304x128xf32>
    %15 = arith.mulf %13, %14 : vector<304x128xf32>
    %16 = arith.addf %10, %15 : vector<304x128xf32>
    %cst = arith.constant 0.000000e+00 : f32
    %17 = vector.broadcast %cst : f32 to vector<304x128xf32>
    %18 = arith.maximumf %16, %17 : vector<304x128xf32>
    %cst_5 = arith.constant dense<0.000000e+00> : vector<304x128xf32>
    %19 = tpu.matmul %18, %2, %cst_5 {dimension_numbers = #tpu.dot_dimension_numbers<[1], [0], [0], [1], [0, 0, 1, 1], [], []>} : vector<304x128xf32>, vector<128x128xf32>, vector<304x128xf32> -> vector<304x128xf32>
    %cst_6 = arith.constant dense<0xFF800000> : vector<304xf32>
    %20 = vector.multi_reduction <maximumf>, %19, %cst_6 [1] : vector<304x128xf32> to vector<304xf32>
    %21 = vector.shape_cast %20 : vector<304xf32> to vector<304x1xf32>
    %22 = vector.broadcast %21 : vector<304x1xf32> to vector<304x128xf32>
    %23 = arith.subf %19, %22 : vector<304x128xf32>
    %24 = math.exp %23 : vector<304x128xf32>
    %cst_7 = arith.constant dense<0.000000e+00> : vector<304xf32>
    %25 = vector.multi_reduction <add>, %24, %cst_7 [1] : vector<304x128xf32> to vector<304xf32>
    %26 = vector.shape_cast %25 : vector<304xf32> to vector<304x1xf32>
    %27 = tpu.reciprocal %26 : vector<304x1xf32> -> vector<304x1xf32>
    %28 = vector.broadcast %27 : vector<304x1xf32> to vector<304x128xf32>
    %29 = arith.mulf %24, %28 : vector<304x128xf32>
    %c0_8 = arith.constant 0 : index
    %c0_9 = arith.constant 0 : index
    %30 = vector.load %arg4[%c0_8, %c0_9] : memref<304x128xf32, #tpu.memory_space<vmem>>, vector<304x128xf32>
    tpu.vector_store %arg4[%c0_8, %c0_9], %29 {strides = array<i32>} : memref<304x128xf32, #tpu.memory_space<vmem>>, vector<304x128xf32>,
    return
  }
  func.func @transform_0(%arg0: i32) -> (i32, i32) {
    %c0_i32 = arith.constant 0 : i32
    %c0_i32_0 = arith.constant 0 : i32
    return %arg0, %c0_i32 : i32, i32
  }
  func.func @transform_1(%arg0: i32) -> (i32, i32) {
    %c0_i32 = arith.constant 0 : i32
    %c0_i32_0 = arith.constant 0 : i32
    %c0_i32_1 = arith.constant 0 : i32
    return %c0_i32, %c0_i32_0 : i32, i32
  }
  func.func @transform_2(%arg0: i32) -> (i32, i32) {
    %c0_i32 = arith.constant 0 : i32
    %c0_i32_0 = arith.constant 0 : i32
    %c0_i32_1 = arith.constant 0 : i32
    return %c0_i32, %c0_i32_0 : i32, i32
  }
  func.func @transform_3(%arg0: i32) -> (i32, i32) {
    %c0_i32 = arith.constant 0 : i32
    %c0_i32_0 = arith.constant 0 : i32
    return %arg0, %c0_i32 : i32, i32
  }
}

</mosaic_0001>

<llo_original>
// kernel: function_approximator_forward.1
$region0: #{function_approximator_forward.1}
  #allocation0 [shape = 'u32[]', space=smem, size = 0x4, offset = 0x4, fixed_abs, tag = 'smem constant byte address 0x4 - core index']
  #allocation1 [shape = 'u32[72,128]{1,0:T(1,128)}', space=vmem, size = 0x9000, scoped, tag = 'internal scratch']
  %s0 = inlined_call_operand.vmem [shape: f32[304,2], index: 0, kind: input, shape index: {}]
  %s1 = inlined_call_operand.vmem [shape: f32[3,128], index: 1, kind: input, shape index: {}]
  %s2 = inlined_call_operand.vmem [shape: f32[128,128], index: 2, kind: input, shape index: {}]
  %s3 = inlined_call_operand.vmem [shape: f32[304,128], index: 3, kind: output, shape index: {}]
  %s4 = sld [smem:[#allocation0]]
  $region22: #{function_approximator_forward.1} parent=0
    _
  %s6 = ssub.s32 1, %s4
  %s7 = scalar_select 0, %s6, %s4
  // Predicated region
  $region2: #{function_approximator_forward.1} parent=0 // pred_check
    _
  $region3: #{function_approximator_forward.1} parent=0 // pred_check_branch
    %9 = sbr.rel (0) target = $region5
  $region4: #{function_approximator_forward.1} parent=0 // pred_region
    _
  $region5: #{function_approximator_forward.1} parent=0 // pred_fallthru
    _
  // Predicated region
  $region6: #{function_approximator_forward.1} parent=0 // pred_check
    _
  $region7: #{function_approximator_forward.1} parent=0 // pred_check_branch
    %11 = sbr.rel (0) target = $region9
  $region8: #{function_approximator_forward.1} parent=0 // pred_region
    _
  $region9: #{function_approximator_forward.1} parent=0 // pred_fallthru
    _
  // Predicated region
  $region10: #{function_approximator_forward.1} parent=0 // pred_check
    _
  $region11: #{function_approximator_forward.1} parent=0 // pred_check_branch
    %13 = sbr.rel (0) target = $region13
  $region12: #{function_approximator_forward.1} parent=0 // pred_region
    _
  $region13: #{function_approximator_forward.1} parent=0 // pred_fallthru
    _
  %v14 = vld [vmem:[%s0] sm:$0xff]
  %v15 = vld [vmem:[%s0 + $0x8] sm:$0xff]
  %v16 = vld [vmem:[%s0 + $0x10] sm:$0xff]
  %v17 = vld [vmem:[%s0 + $0x18] sm:$0xff]
  %v18 = vld [vmem:[%s0 + $0x20] sm:$0xff]
  %v19 = vld [vmem:[%s0 + $0x28] sm:$0xff]
  %v20 = vld [vmem:[%s0 + $0x30] sm:$0xff]
  %v21 = vld [vmem:[%s0 + $0x38] sm:$0xff]
  %v22 = vld [vmem:[%s0 + $0x40] sm:$0xff]
  %v23 = vld [vmem:[%s0 + $0x48] sm:$0xff]
  %v24 = vld [vmem:[%s0 + $0x50] sm:$0xff]
  %v25 = vld [vmem:[%s0 + $0x58] sm:$0xff]
  %v26 = vld [vmem:[%s0 + $0x60] sm:$0xff]
  %v27 = vld [vmem:[%s0 + $0x68] sm:$0xff]
  %v28 = vld [vmem:[%s0 + $0x70] sm:$0xff]
  %v29 = vld [vmem:[%s0 + $0x78] sm:$0xff]
  %v30 = vld [vmem:[%s0 + $0x80] sm:$0xff]
  %v31 = vld [vmem:[%s0 + $0x88] sm:$0xff]
  %v32 = vld [vmem:[%s0 + $0x90] sm:$0xff]
  %v33 = vld [vmem:[%s0 + $0x98] sm:$0xff]
  %v34 = vld [vmem:[%s0 + $0xa0] sm:$0xff]
  %v35 = vld [vmem:[%s0 + $0xa8] sm:$0xff]
  %v36 = vld [vmem:[%s0 + $0xb0] sm:$0xff]
  %v37 = vld [vmem:[%s0 + $0xb8] sm:$0xff]
  %v38 = vld [vmem:[%s0 + $0xc0] sm:$0xff]
  %v39 = vld [vmem:[%s0 + $0xc8] sm:$0xff]
  %v40 = vld [vmem:[%s0 + $0xd0] sm:$0xff]
  %v41 = vld [vmem:[%s0 + $0xd8] sm:$0xff]
  %v42 = vld [vmem:[%s0 + $0xe0] sm:$0xff]
  %v43 = vld [vmem:[%s0 + $0xe8] sm:$0xff]
  %v44 = vld [vmem:[%s0 + $0xf0] sm:$0xff]
  %v45 = vld [vmem:[%s0 + $0xf8] sm:$0xff]
  %v46 = vld [vmem:[%s0 + $0x100] sm:$0xff]
  %v47 = vld [vmem:[%s0 + $0x108] sm:$0xff]
  %v48 = vld [vmem:[%s0 + $0x110] sm:$0xff]
  %v49 = vld [vmem:[%s0 + $0x118] sm:$0xff]
  %v50 = vld [vmem:[%s0 + $0x120] sm:$0xff]
  %v51 = vld [vmem:[%s0 + $0x128] sm:$0xff]
  %v52 = vld [vmem:[%s1] sm:$0x7]
  %v53 = vld [vmem:[%s2] sm:$0xff]
  %v54 = vld [vmem:[%s2 + $0x8] sm:$0xff]
  %v55 = vld [vmem:[%s2 + $0x10] sm:$0xff]
  %v56 = vld [vmem:[%s2 + $0x18] sm:$0xff]
  %v57 = vld [vmem:[%s2 + $0x20] sm:$0xff]
  %v58 = vld [vmem:[%s2 + $0x28] sm:$0xff]
  %v59 = vld [vmem:[%s2 + $0x30] sm:$0xff]
  %v60 = vld [vmem:[%s2 + $0x38] sm:$0xff]
  %v61 = vld [vmem:[%s2 + $0x40] sm:$0xff]
  %v62 = vld [vmem:[%s2 + $0x48] sm:$0xff]
  %v63 = vld [vmem:[%s2 + $0x50] sm:$0xff]
  %v64 = vld [vmem:[%s2 + $0x58] sm:$0xff]
  %v65 = vld [vmem:[%s2 + $0x60] sm:$0xff]
  %v66 = vld [vmem:[%s2 + $0x68] sm:$0xff]
  %v67 = vld [vmem:[%s2 + $0x70] sm:$0xff]
  %v68 = vld [vmem:[%s2 + $0x78] sm:$0xff]
  %70 = vset.pattern.permute.xlu0 0
  %71 = vperm.xlu0 %70, %v14
  %v72 = vpop.permute.xlu0 %71
  %75 = vset.pattern.permute.xlu0 0
  %76 = vperm.xlu0 %75, %v15
  %v77 = vpop.permute.xlu0 %76
  %80 = vset.pattern.permute.xlu0 0
  %81 = vperm.xlu0 %80, %v16
  %v82 = vpop.permute.xlu0 %81
  %85 = vset.pattern.permute.xlu0 0
  %86 = vperm.xlu0 %85, %v17
  %v87 = vpop.permute.xlu0 %86
  %90 = vset.pattern.permute.xlu0 0
  %91 = vperm.xlu0 %90, %v18
  %v92 = vpop.permute.xlu0 %91
  %95 = vset.pattern.permute.xlu0 0
  %96 = vperm.xlu0 %95, %v19
  %v97 = vpop.permute.xlu0 %96
  %100 = vset.pattern.permute.xlu0 0
  %101 = vperm.xlu0 %100, %v20
  %v102 = vpop.permute.xlu0 %101
  %105 = vset.pattern.permute.xlu0 0
  %106 = vperm.xlu0 %105, %v21
  %v107 = vpop.permute.xlu0 %106
  %110 = vset.pattern.permute.xlu0 0
  %111 = vperm.xlu0 %110, %v22
  %v112 = vpop.permute.xlu0 %111
  %115 = vset.pattern.permute.xlu0 0
  %116 = vperm.xlu0 %115, %v23
  %v117 = vpop.permute.xlu0 %116
  %120 = vset.pattern.permute.xlu0 0
  %121 = vperm.xlu0 %120, %v24
  %v122 = vpop.permute.xlu0 %121
  %125 = vset.pattern.permute.xlu0 0
  %126 = vperm.xlu0 %125, %v25
  %v127 = vpop.permute.xlu0 %126
  %130 = vset.pattern.permute.xlu0 0
  %131 = vperm.xlu0 %130, %v26
  %v132 = vpop.permute.xlu0 %131
  %135 = vset.pattern.permute.xlu0 0
  %136 = vperm.xlu0 %135, %v27
  %v137 = vpop.permute.xlu0 %136
  %140 = vset.pattern.permute.xlu0 0
  %141 = vperm.xlu0 %140, %v28
  %v142 = vpop.permute.xlu0 %141
  %145 = vset.pattern.permute.xlu0 0
  %146 = vperm.xlu0 %145, %v29
  %v147 = vpop.permute.xlu0 %146
  %150 = vset.pattern.permute.xlu0 0
  %151 = vperm.xlu0 %150, %v30
  %v152 = vpop.permute.xlu0 %151
  %155 = vset.pattern.permute.xlu0 0
  %156 = vperm.xlu0 %155, %v31
  %v157 = vpop.permute.xlu0 %156
  %160 = vset.pattern.permute.xlu0 0
  %161 = vperm.xlu0 %160, %v32
  %v162 = vpop.permute.xlu0 %161
  %165 = vset.pattern.permute.xlu0 0
  %166 = vperm.xlu0 %165, %v33
  %v167 = vpop.permute.xlu0 %166
  %170 = vset.pattern.permute.xlu0 0
  %171 = vperm.xlu0 %170, %v34
  %v172 = vpop.permute.xlu0 %171
  %175 = vset.pattern.permute.xlu0 0
  %176 = vperm.xlu0 %175, %v35
  %v177 = vpop.permute.xlu0 %176
  %180 = vset.pattern.permute.xlu0 0
  %181 = vperm.xlu0 %180, %v36
  %v182 = vpop.permute.xlu0 %181
  %185 = vset.pattern.permute.xlu0 0
  %186 = vperm.xlu0 %185, %v37
  %v187 = vpop.permute.xlu0 %186
  %190 = vset.pattern.permute.xlu0 0
  %191 = vperm.xlu0 %190, %v38
  %v192 = vpop.permute.xlu0 %191
  %195 = vset.pattern.permute.xlu0 0
  %196 = vperm.xlu0 %195, %v39
  %v197 = vpop.permute.xlu0 %196
  %200 = vset.pattern.permute.xlu0 0
  %201 = vperm.xlu0 %200, %v40
  %v202 = vpop.permute.xlu0 %201
  %205 = vset.pattern.permute.xlu0 0
  %206 = vperm.xlu0 %205, %v41
  %v207 = vpop.permute.xlu0 %206
  %210 = vset.pattern.permute.xlu0 0
  %211 = vperm.xlu0 %210, %v42
  %v212 = vpop.permute.xlu0 %211
  %215 = vset.pattern.permute.xlu0 0
  %216 = vperm.xlu0 %215, %v43
  %v217 = vpop.permute.xlu0 %216
  %220 = vset.pattern.permute.xlu0 0
  %221 = vperm.xlu0 %220, %v44
  %v222 = vpop.permute.xlu0 %221
  %225 = vset.pattern.permute.xlu0 0
  %226 = vperm.xlu0 %225, %v45
  %v227 = vpop.permute.xlu0 %226
  %230 = vset.pattern.permute.xlu0 0
  %231 = vperm.xlu0 %230, %v46
  %v232 = vpop.permute.xlu0 %231
  %235 = vset.pattern.permute.xlu0 0
  %236 = vperm.xlu0 %235, %v47
  %v237 = vpop.permute.xlu0 %236
  %240 = vset.pattern.permute.xlu0 0
  %241 = vperm.xlu0 %240, %v48
  %v242 = vpop.permute.xlu0 %241
  %245 = vset.pattern.permute.xlu0 0
  %246 = vperm.xlu0 %245, %v49
  %v247 = vpop.permute.xlu0 %246
  %250 = vset.pattern.permute.xlu0 0
  %251 = vperm.xlu0 %250, %v50
  %v252 = vpop.permute.xlu0 %251
  %255 = vset.pattern.permute.xlu0 0
  %256 = vperm.xlu0 %255, %v51
  %v257 = vpop.permute.xlu0 %256
  %v259 = vperm.slane %v52, 0
  %v260 = vmul.f32 %v72, %v259
  %v261 = vmul.f32 %v77, %v259
  %v262 = vmul.f32 %v82, %v259
  %v263 = vmul.f32 %v87, %v259
  %v264 = vmul.f32 %v92, %v259
  %v265 = vmul.f32 %v97, %v259
  %v266 = vmul.f32 %v102, %v259
  %v267 = vmul.f32 %v107, %v259
  %v268 = vmul.f32 %v112, %v259
  %v269 = vmul.f32 %v117, %v259
  %v270 = vmul.f32 %v122, %v259
  %v271 = vmul.f32 %v127, %v259
  %v272 = vmul.f32 %v132, %v259
  %v273 = vmul.f32 %v137, %v259
  %v274 = vmul.f32 %v142, %v259
  %v275 = vmul.f32 %v147, %v259
  %v276 = vmul.f32 %v152, %v259
  %v277 = vmul.f32 %v157, %v259
  %v278 = vmul.f32 %v162, %v259
  %v279 = vmul.f32 %v167, %v259
  %v280 = vmul.f32 %v172, %v259
  %v281 = vmul.f32 %v177, %v259
  %v282 = vmul.f32 %v182, %v259
  %v283 = vmul.f32 %v187, %v259
  %v284 = vmul.f32 %v192, %v259
  %v285 = vmul.f32 %v197, %v259
  %v286 = vmul.f32 %v202, %v259
  %v287 = vmul.f32 %v207, %v259
  %v288 = vmul.f32 %v212, %v259
  %v289 = vmul.f32 %v217, %v259
  %v290 = vmul.f32 %v222, %v259
  %v291 = vmul.f32 %v227, %v259
  %v292 = vmul.f32 %v232, %v259
  %v293 = vmul.f32 %v237, %v259
  %v294 = vmul.f32 %v242, %v259
  %v295 = vmul.f32 %v247, %v259
  %v296 = vmul.f32 %v252, %v259
  %v297 = vmul.f32 %v257, %v259
  %v298 = vperm.slane %v52, 2
  %v299 = vadd.f32 %v298, %v260
  %v300 = vadd.f32 %v298, %v261
  %v301 = vadd.f32 %v298, %v262
  %v302 = vadd.f32 %v298, %v263
  %v303 = vadd.f32 %v298, %v264
  %v304 = vadd.f32 %v298, %v265
  %v305 = vadd.f32 %v298, %v266
  %v306 = vadd.f32 %v298, %v267
  %v307 = vadd.f32 %v298, %v268
  %v308 = vadd.f32 %v298, %v269
  %v309 = vadd.f32 %v298, %v270
  %v310 = vadd.f32 %v298, %v271
  %v311 = vadd.f32 %v298, %v272
  %v312 = vadd.f32 %v298, %v273
  %v313 = vadd.f32 %v298, %v274
  %v314 = vadd.f32 %v298, %v275
  %v315 = vadd.f32 %v298, %v276
  %v316 = vadd.f32 %v298, %v277
  %v317 = vadd.f32 %v298, %v278
  %v318 = vadd.f32 %v298, %v279
  %v319 = vadd.f32 %v298, %v280
  %v320 = vadd.f32 %v298, %v281
  %v321 = vadd.f32 %v298, %v282
  %v322 = vadd.f32 %v298, %v283
  %v323 = vadd.f32 %v298, %v284
  %v324 = vadd.f32 %v298, %v285
  %v325 = vadd.f32 %v298, %v286
  %v326 = vadd.f32 %v298, %v287
  %v327 = vadd.f32 %v298, %v288
  %v328 = vadd.f32 %v298, %v289
  %v329 = vadd.f32 %v298, %v290
  %v330 = vadd.f32 %v298, %v291
  %v331 = vadd.f32 %v298, %v292
  %v332 = vadd.f32 %v298, %v293
  %v333 = vadd.f32 %v298, %v294
  %v334 = vadd.f32 %v298, %v295
  %v335 = vadd.f32 %v298, %v296
  %v336 = vadd.f32 %v298, %v297
  %337 = vset.pattern.permute.xlu0 1
  %338 = vperm.xlu0 %337, %v14
  %v339 = vpop.permute.xlu0 %338
  %341 = vset.pattern.permute.xlu0 1
  %342 = vperm.xlu0 %341, %v15
  %v343 = vpop.permute.xlu0 %342
  %345 = vset.pattern.permute.xlu0 1
  %346 = vperm.xlu0 %345, %v16
  %v347 = vpop.permute.xlu0 %346
  %349 = vset.pattern.permute.xlu0 1
  %350 = vperm.xlu0 %349, %v17
  %v351 = vpop.permute.xlu0 %350
  %353 = vset.pattern.permute.xlu0 1
  %354 = vperm.xlu0 %353, %v18
  %v355 = vpop.permute.xlu0 %354
  %357 = vset.pattern.permute.xlu0 1
  %358 = vperm.xlu0 %357, %v19
  %v359 = vpop.permute.xlu0 %358
  %361 = vset.pattern.permute.xlu0 1
  %362 = vperm.xlu0 %361, %v20
  %v363 = vpop.permute.xlu0 %362
  %365 = vset.pattern.permute.xlu0 1
  %366 = vperm.xlu0 %365, %v21
  %v367 = vpop.permute.xlu0 %366
  %369 = vset.pattern.permute.xlu0 1
  %370 = vperm.xlu0 %369, %v22
  %v371 = vpop.permute.xlu0 %370
  %373 = vset.pattern.permute.xlu0 1
  %374 = vperm.xlu0 %373, %v23
  %v375 = vpop.permute.xlu0 %374
  %377 = vset.pattern.permute.xlu0 1
  %378 = vperm.xlu0 %377, %v24
  %v379 = vpop.permute.xlu0 %378
  %381 = vset.pattern.permute.xlu0 1
  %382 = vperm.xlu0 %381, %v25
  %v383 = vpop.permute.xlu0 %382
  %385 = vset.pattern.permute.xlu0 1
  %386 = vperm.xlu0 %385, %v26
  %v387 = vpop.permute.xlu0 %386
  %389 = vset.pattern.permute.xlu0 1
  %390 = vperm.xlu0 %389, %v27
  %v391 = vpop.permute.xlu0 %390
  %393 = vset.pattern.permute.xlu0 1
  %394 = vperm.xlu0 %393, %v28
  %v395 = vpop.permute.xlu0 %394
  %397 = vset.pattern.permute.xlu0 1
  %398 = vperm.xlu0 %397, %v29
  %v399 = vpop.permute.xlu0 %398
  %401 = vset.pattern.permute.xlu0 1
  %402 = vperm.xlu0 %401, %v30
  %v403 = vpop.permute.xlu0 %402
  %405 = vset.pattern.permute.xlu0 1
  %406 = vperm.xlu0 %405, %v31
  %v407 = vpop.permute.xlu0 %406
  %409 = vset.pattern.permute.xlu0 1
  %410 = vperm.xlu0 %409, %v32
  %v411 = vpop.permute.xlu0 %410
  %413 = vset.pattern.permute.xlu0 1
  %414 = vperm.xlu0 %413, %v33
  %v415 = vpop.permute.xlu0 %414
  %417 = vset.pattern.permute.xlu0 1
  %418 = vperm.xlu0 %417, %v34
  %v419 = vpop.permute.xlu0 %418
  %421 = vset.pattern.permute.xlu0 1
  %422 = vperm.xlu0 %421, %v35
  %v423 = vpop.permute.xlu0 %422
  %425 = vset.pattern.permute.xlu0 1
  %426 = vperm.xlu0 %425, %v36
  %v427 = vpop.permute.xlu0 %426
  %429 = vset.pattern.permute.xlu0 1
  %430 = vperm.xlu0 %429, %v37
  %v431 = vpop.permute.xlu0 %430
  %433 = vset.pattern.permute.xlu0 1
  %434 = vperm.xlu0 %433, %v38
  %v435 = vpop.permute.xlu0 %434
  %437 = vset.pattern.permute.xlu0 1
  %438 = vperm.xlu0 %437, %v39
  %v439 = vpop.permute.xlu0 %438
  %441 = vset.pattern.permute.xlu0 1
  %442 = vperm.xlu0 %441, %v40
  %v443 = vpop.permute.xlu0 %442
  %445 = vset.pattern.permute.xlu0 1
  %446 = vperm.xlu0 %445, %v41
  %v447 = vpop.permute.xlu0 %446
  %449 = vset.pattern.permute.xlu0 1
  %450 = vperm.xlu0 %449, %v42
  %v451 = vpop.permute.xlu0 %450
  %453 = vset.pattern.permute.xlu0 1
  %454 = vperm.xlu0 %453, %v43
  %v455 = vpop.permute.xlu0 %454
  %457 = vset.pattern.permute.xlu0 1
  %458 = vperm.xlu0 %457, %v44
  %v459 = vpop.permute.xlu0 %458
  %461 = vset.pattern.permute.xlu0 1
  %462 = vperm.xlu0 %461, %v45
  %v463 = vpop.permute.xlu0 %462
  %465 = vset.pattern.permute.xlu0 1
  %466 = vperm.xlu0 %465, %v46
  %v467 = vpop.permute.xlu0 %466
  %469 = vset.pattern.permute.xlu0 1
  %470 = vperm.xlu0 %469, %v47
  %v471 = vpop.permute.xlu0 %470
  %473 = vset.pattern.permute.xlu0 1
  %474 = vperm.xlu0 %473, %v48
  %v475 = vpop.permute.xlu0 %474
  %477 = vset.pattern.permute.xlu0 1
  %478 = vperm.xlu0 %477, %v49
  %v479 = vpop.permute.xlu0 %478
  %481 = vset.pattern.permute.xlu0 1
  %482 = vperm.xlu0 %481, %v50
  %v483 = vpop.permute.xlu0 %482
  %485 = vset.pattern.permute.xlu0 1
  %486 = vperm.xlu0 %485, %v51
  %v487 = vpop.permute.xlu0 %486
  %v489 = vperm.slane %v52, 1
  %v490 = vmul.f32 %v339, %v489
  %v491 = vmul.f32 %v343, %v489
  %v492 = vmul.f32 %v347, %v489
  %v493 = vmul.f32 %v351, %v489
  %v494 = vmul.f32 %v355, %v489
  %v495 = vmul.f32 %v359, %v489
  %v496 = vmul.f32 %v363, %v489
  %v497 = vmul.f32 %v367, %v489
  %v498 = vmul.f32 %v371, %v489
  %v499 = vmul.f32 %v375, %v489
  %v500 = vmul.f32 %v379, %v489
  %v501 = vmul.f32 %v383, %v489
  %v502 = vmul.f32 %v387, %v489
  %v503 = vmul.f32 %v391, %v489
  %v504 = vmul.f32 %v395, %v489
  %v505 = vmul.f32 %v399, %v489
  %v506 = vmul.f32 %v403, %v489
  %v507 = vmul.f32 %v407, %v489
  %v508 = vmul.f32 %v411, %v489
  %v509 = vmul.f32 %v415, %v489
  %v510 = vmul.f32 %v419, %v489
  %v511 = vmul.f32 %v423, %v489
  %v512 = vmul.f32 %v427, %v489
  %v513 = vmul.f32 %v431, %v489
  %v514 = vmul.f32 %v435, %v489
  %v515 = vmul.f32 %v439, %v489
  %v516 = vmul.f32 %v443, %v489
  %v517 = vmul.f32 %v447, %v489
  %v518 = vmul.f32 %v451, %v489
  %v519 = vmul.f32 %v455, %v489
  %v520 = vmul.f32 %v459, %v489
  %v521 = vmul.f32 %v463, %v489
  %v522 = vmul.f32 %v467, %v489
  %v523 = vmul.f32 %v471, %v489
  %v524 = vmul.f32 %v475, %v489
  %v525 = vmul.f32 %v479, %v489
  %v526 = vmul.f32 %v483, %v489
  %v527 = vmul.f32 %v487, %v489
  %v528 = vadd.f32 %v299, %v490
  %v529 = vadd.f32 %v300, %v491
  %v530 = vadd.f32 %v301, %v492
  %v531 = vadd.f32 %v302, %v493
  %v532 = vadd.f32 %v303, %v494
  %v533 = vadd.f32 %v304, %v495
  %v534 = vadd.f32 %v305, %v496
  %v535 = vadd.f32 %v306, %v497
  %v536 = vadd.f32 %v307, %v498
  %v537 = vadd.f32 %v308, %v499
  %v538 = vadd.f32 %v309, %v500
  %v539 = vadd.f32 %v310, %v501
  %v540 = vadd.f32 %v311, %v502
  %v541 = vadd.f32 %v312, %v503
  %v542 = vadd.f32 %v313, %v504
  %v543 = vadd.f32 %v314, %v505
  %v544 = vadd.f32 %v315, %v506
  %v545 = vadd.f32 %v316, %v507
  %v546 = vadd.f32 %v317, %v508
  %v547 = vadd.f32 %v318, %v509
  %v548 = vadd.f32 %v319, %v510
  %v549 = vadd.f32 %v320, %v511
  %v550 = vadd.f32 %v321, %v512
  %v551 = vadd.f32 %v322, %v513
  %v552 = vadd.f32 %v323, %v514
  %v553 = vadd.f32 %v324, %v515
  %v554 = vadd.f32 %v325, %v516
  %v555 = vadd.f32 %v326, %v517
  %v556 = vadd.f32 %v327, %v518
  %v557 = vadd.f32 %v328, %v519
  %v558 = vadd.f32 %v329, %v520
  %v559 = vadd.f32 %v330, %v521
  %v560 = vadd.f32 %v331, %v522
  %v561 = vadd.f32 %v332, %v523
  %v562 = vadd.f32 %v333, %v524
  %v563 = vadd.f32 %v334, %v525
  %v564 = vadd.f32 %v335, %v526
  %v565 = vadd.f32 %v336, %v527
  %v566 = vmax.f32 %v528, 0.0
  %v567 = vmax.f32 %v529, 0.0
  %v568 = vmax.f32 %v530, 0.0
  %v569 = vmax.f32 %v531, 0.0
  %v570 = vmax.f32 %v532, 0.0
  %v571 = vmax.f32 %v533, 0.0
  %v572 = vmax.f32 %v534, 0.0
  %v573 = vmax.f32 %v535, 0.0
  %v574 = vmax.f32 %v536, 0.0
  %v575 = vmax.f32 %v537, 0.0
  %v576 = vmax.f32 %v538, 0.0
  %v577 = vmax.f32 %v539, 0.0
  %v578 = vmax.f32 %v540, 0.0
  %v579 = vmax.f32 %v541, 0.0
  %v580 = vmax.f32 %v542, 0.0
  %v581 = vmax.f32 %v543, 0.0
  %v582 = vmax.f32 %v544, 0.0
  %v583 = vmax.f32 %v545, 0.0
  %v584 = vmax.f32 %v546, 0.0
  %v585 = vmax.f32 %v547, 0.0
  %v586 = vmax.f32 %v548, 0.0
  %v587 = vmax.f32 %v549, 0.0
  %v588 = vmax.f32 %v550, 0.0
  %v589 = vmax.f32 %v551, 0.0
  %v590 = vmax.f32 %v552, 0.0
  %v591 = vmax.f32 %v553, 0.0
  %v592 = vmax.f32 %v554, 0.0
  %v593 = vmax.f32 %v555, 0.0
  %v594 = vmax.f32 %v556, 0.0
  %v595 = vmax.f32 %v557, 0.0
  %v596 = vmax.f32 %v558, 0.0
  %v597 = vmax.f32 %v559, 0.0
  %v598 = vmax.f32 %v560, 0.0
  %v599 = vmax.f32 %v561, 0.0
  %v600 = vmax.f32 %v562, 0.0
  %v601 = vmax.f32 %v563, 0.0
  %v602 = vmax.f32 %v564, 0.0
  %v603 = vmax.f32 %v565, 0.0
  %604 = vmatpush.msra.mxu0 %v68
  %605 = vmatpush.msra.mxu0 %v67
  %606 = vmatpush.msra.mxu0 %v66
  %607 = vmatpush.msra.mxu0 %v65
  %608 = vmatpush.msra.mxu0 %v64
  %609 = vmatpush.msra.mxu0 %v63
  %610 = vmatpush.msra.mxu0 %v62
  %611 = vmatpush.msra.mxu0 %v61
  %612 = vmatpush.msra.mxu0 %v60
  %613 = vmatpush.msra.mxu0 %v59
  %614 = vmatpush.msra.mxu0 %v58
  %615 = vmatpush.msra.mxu0 %v57
  %616 = vmatpush.msra.mxu0 %v56
  %617 = vmatpush.msra.mxu0 %v55
  %618 = vmatpush.msra.mxu0 %v54
  %619 = vmatpush.msra.mxu0 %v53
  %620 = vmatmul.f32.gmra.mxu0 %v566
  %v621 = vpop.f32.mrf.mxu0
  %v622 = vadd.f32 0.0, %v621
  %623 = vmatmul.f32.gmra.mxu0 %v567
  %v624 = vpop.f32.mrf.mxu0
  %v625 = vadd.f32 0.0, %v624
  %626 = vmatmul.f32.gmra.mxu0 %v568
  %v627 = vpop.f32.mrf.mxu0
  %v628 = vadd.f32 0.0, %v627
  %629 = vmatmul.f32.gmra.mxu0 %v569
  %v630 = vpop.f32.mrf.mxu0
  %v631 = vadd.f32 0.0, %v630
  %632 = vmatmul.f32.gmra.mxu0 %v570
  %v633 = vpop.f32.mrf.mxu0
  %v634 = vadd.f32 0.0, %v633
  %635 = vmatmul.f32.gmra.mxu0 %v571
  %v636 = vpop.f32.mrf.mxu0
  %v637 = vadd.f32 0.0, %v636
  %638 = vmatmul.f32.gmra.mxu0 %v572
  %v639 = vpop.f32.mrf.mxu0
  %v640 = vadd.f32 0.0, %v639
  %641 = vmatmul.f32.gmra.mxu0 %v573
  %v642 = vpop.f32.mrf.mxu0
  %v643 = vadd.f32 0.0, %v642
  %644 = vmatmul.f32.gmra.mxu0 %v574
  %v645 = vpop.f32.mrf.mxu0
  %v646 = vadd.f32 0.0, %v645
  %647 = vmatmul.f32.gmra.mxu0 %v575
  %v648 = vpop.f32.mrf.mxu0
  %v649 = vadd.f32 0.0, %v648
  %650 = vmatmul.f32.gmra.mxu0 %v576
  %v651 = vpop.f32.mrf.mxu0
  %v652 = vadd.f32 0.0, %v651
  %653 = vmatmul.f32.gmra.mxu0 %v577
  %v654 = vpop.f32.mrf.mxu0
  %v655 = vadd.f32 0.0, %v654
  %656 = vmatmul.f32.gmra.mxu0 %v578
  %v657 = vpop.f32.mrf.mxu0
  %v658 = vadd.f32 0.0, %v657
  %659 = vmatmul.f32.gmra.mxu0 %v579
  %v660 = vpop.f32.mrf.mxu0
  %v661 = vadd.f32 0.0, %v660
  %662 = vmatmul.f32.gmra.mxu0 %v580
  %v663 = vpop.f32.mrf.mxu0
  %v664 = vadd.f32 0.0, %v663
  %665 = vmatmul.f32.gmra.mxu0 %v581
  %v666 = vpop.f32.mrf.mxu0
  %v667 = vadd.f32 0.0, %v666
  %668 = vmatmul.f32.gmra.mxu0 %v582
  %v669 = vpop.f32.mrf.mxu0
  %v670 = vadd.f32 0.0, %v669
  %671 = vmatmul.f32.gmra.mxu0 %v583
  %v672 = vpop.f32.mrf.mxu0
  %v673 = vadd.f32 0.0, %v672
  %674 = vmatmul.f32.gmra.mxu0 %v584
  %v675 = vpop.f32.mrf.mxu0
  %v676 = vadd.f32 0.0, %v675
  %677 = vmatmul.f32.gmra.mxu0 %v585
  %v678 = vpop.f32.mrf.mxu0
  %v679 = vadd.f32 0.0, %v678
  %680 = vmatmul.f32.gmra.mxu0 %v586
  %v681 = vpop.f32.mrf.mxu0
  %v682 = vadd.f32 0.0, %v681
  %683 = vmatmul.f32.gmra.mxu0 %v587
  %v684 = vpop.f32.mrf.mxu0
  %v685 = vadd.f32 0.0, %v684
  %686 = vmatmul.f32.gmra.mxu0 %v588
  %v687 = vpop.f32.mrf.mxu0
  %v688 = vadd.f32 0.0, %v687
  %689 = vmatmul.f32.gmra.mxu0 %v589
  %v690 = vpop.f32.mrf.mxu0
  %v691 = vadd.f32 0.0, %v690
  %692 = vmatmul.f32.gmra.mxu0 %v590
  %v693 = vpop.f32.mrf.mxu0
  %v694 = vadd.f32 0.0, %v693
  %695 = vmatmul.f32.gmra.mxu0 %v591
  %v696 = vpop.f32.mrf.mxu0
  %v697 = vadd.f32 0.0, %v696
  %698 = vmatmul.f32.gmra.mxu0 %v592
  %v699 = vpop.f32.mrf.mxu0
  %v700 = vadd.f32 0.0, %v699
  %701 = vmatmul.f32.gmra.mxu0 %v593
  %v702 = vpop.f32.mrf.mxu0
  %v703 = vadd.f32 0.0, %v702
  %704 = vmatmul.f32.gmra.mxu0 %v594
  %v705 = vpop.f32.mrf.mxu0
  %v706 = vadd.f32 0.0, %v705
  %707 = vmatmul.f32.gmra.mxu0 %v595
  %v708 = vpop.f32.mrf.mxu0
  %v709 = vadd.f32 0.0, %v708
  %710 = vmatmul.f32.gmra.mxu0 %v596
  %v711 = vpop.f32.mrf.mxu0
  %v712 = vadd.f32 0.0, %v711
  %713 = vmatmul.f32.gmra.mxu0 %v597
  %v714 = vpop.f32.mrf.mxu0
  %v715 = vadd.f32 0.0, %v714
  %716 = vmatmul.f32.gmra.mxu0 %v598
  %v717 = vpop.f32.mrf.mxu0
  %v718 = vadd.f32 0.0, %v717
  %719 = vmatmul.f32.gmra.mxu0 %v599
  %v720 = vpop.f32.mrf.mxu0
  %v721 = vadd.f32 0.0, %v720
  %722 = vmatmul.f32.gmra.mxu0 %v600
  %v723 = vpop.f32.mrf.mxu0
  %v724 = vadd.f32 0.0, %v723
  %725 = vmatmul.f32.gmra.mxu0 %v601
  %v726 = vpop.f32.mrf.mxu0
  %v727 = vadd.f32 0.0, %v726
  %728 = vmatmul.f32.gmra.mxu0 %v602
  %v729 = vpop.f32.mrf.mxu0
  %v730 = vadd.f32 0.0, %v729
  %731 = vmatmul.f32.gmra.mxu0 %v603
  %v732 = vpop.f32.mrf.mxu0
  %v733 = vadd.f32 0.0, %v732
  %734 = vdwg.mxu0
  %735 = vmax.xlane.f32.xlu0 %v622
  %v736 = vpop.xlane.xlu0 %735
  %737 = vmax.xlane.f32.xlu0 %v625
  %v738 = vpop.xlane.xlu0 %737
  %739 = vmax.xlane.f32.xlu0 %v628
  %v740 = vpop.xlane.xlu0 %739
  %741 = vmax.xlane.f32.xlu0 %v631
  %v742 = vpop.xlane.xlu0 %741
  %743 = vmax.xlane.f32.xlu0 %v634
  %v744 = vpop.xlane.xlu0 %743
  %745 = vmax.xlane.f32.xlu0 %v637
  %v746 = vpop.xlane.xlu0 %745
  %747 = vmax.xlane.f32.xlu0 %v640
  %v748 = vpop.xlane.xlu0 %747
  %749 = vmax.xlane.f32.xlu0 %v643
  %v750 = vpop.xlane.xlu0 %749
  %751 = vmax.xlane.f32.xlu0 %v646
  %v752 = vpop.xlane.xlu0 %751
  %753 = vmax.xlane.f32.xlu0 %v649
  %v754 = vpop.xlane.xlu0 %753
  %755 = vmax.xlane.f32.xlu0 %v652
  %v756 = vpop.xlane.xlu0 %755
  %757 = vmax.xlane.f32.xlu0 %v655
  %v758 = vpop.xlane.xlu0 %757
  %759 = vmax.xlane.f32.xlu0 %v658
  %v760 = vpop.xlane.xlu0 %759
  %761 = vmax.xlane.f32.xlu0 %v661
  %v762 = vpop.xlane.xlu0 %761
  %763 = vmax.xlane.f32.xlu0 %v664
  %v764 = vpop.xlane.xlu0 %763
  %765 = vmax.xlane.f32.xlu0 %v667
  %v766 = vpop.xlane.xlu0 %765
  %767 = vmax.xlane.f32.xlu0 %v670
  %v768 = vpop.xlane.xlu0 %767
  %769 = vmax.xlane.f32.xlu0 %v673
  %v770 = vpop.xlane.xlu0 %769
  %771 = vmax.xlane.f32.xlu0 %v676
  %v772 = vpop.xlane.xlu0 %771
  %773 = vmax.xlane.f32.xlu0 %v679
  %v774 = vpop.xlane.xlu0 %773
  %775 = vmax.xlane.f32.xlu0 %v682
  %v776 = vpop.xlane.xlu0 %775
  %777 = vmax.xlane.f32.xlu0 %v685
  %v778 = vpop.xlane.xlu0 %777
  %779 = vmax.xlane.f32.xlu0 %v688
  %v780 = vpop.xlane.xlu0 %779
  %781 = vmax.xlane.f32.xlu0 %v691
  %v782 = vpop.xlane.xlu0 %781
  %783 = vmax.xlane.f32.xlu0 %v694
  %v784 = vpop.xlane.xlu0 %783
  %785 = vmax.xlane.f32.xlu0 %v697
  %v786 = vpop.xlane.xlu0 %785
  %787 = vmax.xlane.f32.xlu0 %v700
  %v788 = vpop.xlane.xlu0 %787
  %789 = vmax.xlane.f32.xlu0 %v703
  %v790 = vpop.xlane.xlu0 %789
  %791 = vmax.xlane.f32.xlu0 %v706
  %v792 = vpop.xlane.xlu0 %791
  %793 = vmax.xlane.f32.xlu0 %v709
  %v794 = vpop.xlane.xlu0 %793
  %795 = vmax.xlane.f32.xlu0 %v712
  %v796 = vpop.xlane.xlu0 %795
  %797 = vmax.xlane.f32.xlu0 %v715
  %v798 = vpop.xlane.xlu0 %797
  %799 = vmax.xlane.f32.xlu0 %v718
  %v800 = vpop.xlane.xlu0 %799
  %801 = vmax.xlane.f32.xlu0 %v721
  %v802 = vpop.xlane.xlu0 %801
  %803 = vmax.xlane.f32.xlu0 %v724
  %v804 = vpop.xlane.xlu0 %803
  %805 = vmax.xlane.f32.xlu0 %v727
  %v806 = vpop.xlane.xlu0 %805
  %807 = vmax.xlane.f32.xlu0 %v730
  %v808 = vpop.xlane.xlu0 %807
  %809 = vmax.xlane.f32.xlu0 %v733
  %v810 = vpop.xlane.xlu0 %809
  %v811 = vsub.f32 %v622, %v736
  %v812 = vsub.f32 %v625, %v738
  %v813 = vsub.f32 %v628, %v740
  %v814 = vsub.f32 %v631, %v742
  %v815 = vsub.f32 %v634, %v744
  %v816 = vsub.f32 %v637, %v746
  %v817 = vsub.f32 %v640, %v748
  %v818 = vsub.f32 %v643, %v750
  %v819 = vsub.f32 %v646, %v752
  %v820 = vsub.f32 %v649, %v754
  %v821 = vsub.f32 %v652, %v756
  %v822 = vsub.f32 %v655, %v758
  %v823 = vsub.f32 %v658, %v760
  %v824 = vsub.f32 %v661, %v762
  %v825 = vsub.f32 %v664, %v764
  %v826 = vsub.f32 %v667, %v766
  %v827 = vsub.f32 %v670, %v768
  %v828 = vsub.f32 %v673, %v770
  %v829 = vsub.f32 %v676, %v772
  %v830 = vsub.f32 %v679, %v774
  %v831 = vsub.f32 %v682, %v776
  %v832 = vsub.f32 %v685, %v778
  %v833 = vsub.f32 %v688, %v780
  %v834 = vsub.f32 %v691, %v782
  %v835 = vsub.f32 %v694, %v784
  %v836 = vsub.f32 %v697, %v786
  %v837 = vsub.f32 %v700, %v788
  %v838 = vsub.f32 %v703, %v790
  %v839 = vsub.f32 %v706, %v792
  %v840 = vsub.f32 %v709, %v794
  %v841 = vsub.f32 %v712, %v796
  %v842 = vsub.f32 %v715, %v798
  %v843 = vsub.f32 %v718, %v800
  %v844 = vsub.f32 %v721, %v802
  %v845 = vsub.f32 %v724, %v804
  %v846 = vsub.f32 %v727, %v806
  %v847 = vsub.f32 %v730, %v808
  %v848 = vsub.f32 %v733, %v810
  %v849 = vmul.f32 %v811, 1.442695
  %v850 = vpow.pop %v849
  %v851 = vmul.f32 %v812, 1.442695
  %v852 = vpow.pop %v851
  %v853 = vmul.f32 %v813, 1.442695
  %v854 = vpow.pop %v853
  %v855 = vmul.f32 %v814, 1.442695
  %v856 = vpow.pop %v855
  %v857 = vmul.f32 %v815, 1.442695
  %v858 = vpow.pop %v857
  %v859 = vmul.f32 %v816, 1.442695
  %v860 = vpow.pop %v859
  %v861 = vmul.f32 %v817, 1.442695
  %v862 = vpow.pop %v861
  %v863 = vmul.f32 %v818, 1.442695
  %v864 = vpow.pop %v863
  %v865 = vmul.f32 %v819, 1.442695
  %v866 = vpow.pop %v865
  %v867 = vmul.f32 %v820, 1.442695
  %v868 = vpow.pop %v867
  %v869 = vmul.f32 %v821, 1.442695
  %v870 = vpow.pop %v869
  %v871 = vmul.f32 %v822, 1.442695
  %v872 = vpow.pop %v871
  %v873 = vmul.f32 %v823, 1.442695
  %v874 = vpow.pop %v873
  %v875 = vmul.f32 %v824, 1.442695
  %v876 = vpow.pop %v875
  %v877 = vmul.f32 %v825, 1.442695
  %v878 = vpow.pop %v877
  %v879 = vmul.f32 %v826, 1.442695
  %v880 = vpow.pop %v879
  %v881 = vmul.f32 %v827, 1.442695
  %v882 = vpow.pop %v881
  %v883 = vmul.f32 %v828, 1.442695
  %v884 = vpow.pop %v883
  %v885 = vmul.f32 %v829, 1.442695
  %v886 = vpow.pop %v885
  %v887 = vmul.f32 %v830, 1.442695
  %v888 = vpow.pop %v887
  %v889 = vmul.f32 %v831, 1.442695
  %v890 = vpow.pop %v889
  %v891 = vmul.f32 %v832, 1.442695
  %v892 = vpow.pop %v891
  %v893 = vmul.f32 %v833, 1.442695
  %v894 = vpow.pop %v893
  %v895 = vmul.f32 %v834, 1.442695
  %v896 = vpow.pop %v895
  %v897 = vmul.f32 %v835, 1.442695
  %v898 = vpow.pop %v897
  %v899 = vmul.f32 %v836, 1.442695
  %v900 = vpow.pop %v899
  %v901 = vmul.f32 %v837, 1.442695
  %v902 = vpow.pop %v901
  %v903 = vmul.f32 %v838, 1.442695
  %v904 = vpow.pop %v903
  %v905 = vmul.f32 %v839, 1.442695
  %v906 = vpow.pop %v905
  %v907 = vmul.f32 %v840, 1.442695
  %v908 = vpow.pop %v907
  %v909 = vmul.f32 %v841, 1.442695
  %v910 = vpow.pop %v909
  %v911 = vmul.f32 %v842, 1.442695
  %v912 = vpow.pop %v911
  %v913 = vmul.f32 %v843, 1.442695
  %v914 = vpow.pop %v913
  %v915 = vmul.f32 %v844, 1.442695
  %v916 = vpow.pop %v915
  %v917 = vmul.f32 %v845, 1.442695
  %v918 = vpow.pop %v917
  %v919 = vmul.f32 %v846, 1.442695
  %v920 = vpow.pop %v919
  %v921 = vmul.f32 %v847, 1.442695
  %v922 = vpow.pop %v921
  %v923 = vmul.f32 %v848, 1.442695
  %v924 = vpow.pop %v923
  %925 = vadd.xlane.f32.xlu0 %v850
  %v926 = vpop.xlane.xlu0 %925
  %927 = vadd.xlane.f32.xlu0 %v852
  %v928 = vpop.xlane.xlu0 %927
  %929 = vadd.xlane.f32.xlu0 %v854
  %v930 = vpop.xlane.xlu0 %929
  %931 = vadd.xlane.f32.xlu0 %v856
  %v932 = vpop.xlane.xlu0 %931
  %933 = vadd.xlane.f32.xlu0 %v858
  %v934 = vpop.xlane.xlu0 %933
  %935 = vadd.xlane.f32.xlu0 %v860
  %v936 = vpop.xlane.xlu0 %935
  %937 = vadd.xlane.f32.xlu0 %v862
  %v938 = vpop.xlane.xlu0 %937
  %939 = vadd.xlane.f32.xlu0 %v864
  %v940 = vpop.xlane.xlu0 %939
  %941 = vadd.xlane.f32.xlu0 %v866
  %v942 = vpop.xlane.xlu0 %941
  %943 = vadd.xlane.f32.xlu0 %v868
  %v944 = vpop.xlane.xlu0 %943
  %945 = vadd.xlane.f32.xlu0 %v870
  %v946 = vpop.xlane.xlu0 %945
  %947 = vadd.xlane.f32.xlu0 %v872
  %v948 = vpop.xlane.xlu0 %947
  %949 = vadd.xlane.f32.xlu0 %v874
  %v950 = vpop.xlane.xlu0 %949
  %951 = vadd.xlane.f32.xlu0 %v876
  %v952 = vpop.xlane.xlu0 %951
  %953 = vadd.xlane.f32.xlu0 %v878
  %v954 = vpop.xlane.xlu0 %953
  %955 = vadd.xlane.f32.xlu0 %v880
  %v956 = vpop.xlane.xlu0 %955
  %957 = vadd.xlane.f32.xlu0 %v882
  %v958 = vpop.xlane.xlu0 %957
  %959 = vadd.xlane.f32.xlu0 %v884
  %v960 = vpop.xlane.xlu0 %959
  %961 = vadd.xlane.f32.xlu0 %v886
  %v962 = vpop.xlane.xlu0 %961
  %963 = vadd.xlane.f32.xlu0 %v888
  %v964 = vpop.xlane.xlu0 %963
  %965 = vadd.xlane.f32.xlu0 %v890
  %v966 = vpop.xlane.xlu0 %965
  %967 = vadd.xlane.f32.xlu0 %v892
  %v968 = vpop.xlane.xlu0 %967
  %969 = vadd.xlane.f32.xlu0 %v894
  %v970 = vpop.xlane.xlu0 %969
  %971 = vadd.xlane.f32.xlu0 %v896
  %v972 = vpop.xlane.xlu0 %971
  %973 = vadd.xlane.f32.xlu0 %v898
  %v974 = vpop.xlane.xlu0 %973
  %975 = vadd.xlane.f32.xlu0 %v900
  %v976 = vpop.xlane.xlu0 %975
  %977 = vadd.xlane.f32.xlu0 %v902
  %v978 = vpop.xlane.xlu0 %977
  %979 = vadd.xlane.f32.xlu0 %v904
  %v980 = vpop.xlane.xlu0 %979
  %981 = vadd.xlane.f32.xlu0 %v906
  %v982 = vpop.xlane.xlu0 %981
  %983 = vadd.xlane.f32.xlu0 %v908
  %v984 = vpop.xlane.xlu0 %983
  %985 = vadd.xlane.f32.xlu0 %v910
  %v986 = vpop.xlane.xlu0 %985
  %987 = vadd.xlane.f32.xlu0 %v912
  %v988 = vpop.xlane.xlu0 %987
  %989 = vadd.xlane.f32.xlu0 %v914
  %v990 = vpop.xlane.xlu0 %989
  %991 = vadd.xlane.f32.xlu0 %v916
  %v992 = vpop.xlane.xlu0 %991
  %993 = vadd.xlane.f32.xlu0 %v918
  %v994 = vpop.xlane.xlu0 %993
  %995 = vadd.xlane.f32.xlu0 %v920
  %v996 = vpop.xlane.xlu0 %995
  %997 = vadd.xlane.f32.xlu0 %v922
  %v998 = vpop.xlane.xlu0 %997
  %999 = vadd.xlane.f32.xlu0 %v924
  %v1000 = vpop.xlane.xlu0 %999
  %v1001 = vrcp.pop %v926
  %v1002 = vmul.f32 %v926, %v1001
  %v1003 = vsub.f32 1.0, %v1002
  %v1004 = vmul.f32 %v1001, %v1003
  %v1005 = vadd.f32 %v1001, %v1004
  %vm1006 = vweird.f32 %v926
  %vm1007 = vweird.f32 %v1001
  %vm1008 = vmor %vm1006, %vm1007
  %v1009 = vsel %vm1008, %v1001, %v1005
  %v1010 = vand.u32 2147483647, %v926
  %vm1011 = vcmp.eq.f32.partialorder %v1010, 8.507059e+37
  %v1012 = vand.u32 %v926, 2147483648
  %v1013 = vor.u32 1.1754944e-38, %v1012
  %v1014 = vsel %vm1011, %v1013, %v1009
  %v1015 = vrcp.pop %v928
  %v1016 = vmul.f32 %v928, %v1015
  %v1017 = vsub.f32 1.0, %v1016
  %v1018 = vmul.f32 %v1015, %v1017
  %v1019 = vadd.f32 %v1015, %v1018
  %vm1020 = vweird.f32 %v928
  %vm1021 = vweird.f32 %v1015
  %vm1022 = vmor %vm1020, %vm1021
  %v1023 = vsel %vm1022, %v1015, %v1019
  %v1024 = vand.u32 2147483647, %v928
  %vm1025 = vcmp.eq.f32.partialorder %v1024, 8.507059e+37
  %v1026 = vand.u32 %v928, 2147483648
  %v1027 = vor.u32 1.1754944e-38, %v1026
  %v1028 = vsel %vm1025, %v1027, %v1023
  %v1029 = vrcp.pop %v930
  %v1030 = vmul.f32 %v930, %v1029
  %v1031 = vsub.f32 1.0, %v1030
  %v1032 = vmul.f32 %v1029, %v1031
  %v1033 = vadd.f32 %v1029, %v1032
  %vm1034 = vweird.f32 %v930
  %vm1035 = vweird.f32 %v1029
  %vm1036 = vmor %vm1034, %vm1035
  %v1037 = vsel %vm1036, %v1029, %v1033
  %v1038 = vand.u32 2147483647, %v930
  %vm1039 = vcmp.eq.f32.partialorder %v1038, 8.507059e+37
  %v1040 = vand.u32 %v930, 2147483648
  %v1041 = vor.u32 1.1754944e-38, %v1040
  %v1042 = vsel %vm1039, %v1041, %v1037
  %v1043 = vrcp.pop %v932
  %v1044 = vmul.f32 %v932, %v1043
  %v1045 = vsub.f32 1.0, %v1044
  %v1046 = vmul.f32 %v1043, %v1045
  %v1047 = vadd.f32 %v1043, %v1046
  %vm1048 = vweird.f32 %v932
  %vm1049 = vweird.f32 %v1043
  %vm1050 = vmor %vm1048, %vm1049
  %v1051 = vsel %vm1050, %v1043, %v1047
  %v1052 = vand.u32 2147483647, %v932
  %vm1053 = vcmp.eq.f32.partialorder %v1052, 8.507059e+37
  %v1054 = vand.u32 %v932, 2147483648
  %v1055 = vor.u32 1.1754944e-38, %v1054
  %v1056 = vsel %vm1053, %v1055, %v1051
  %v1057 = vrcp.pop %v934
  %v1058 = vmul.f32 %v934, %v1057
  %v1059 = vsub.f32 1.0, %v1058
  %v1060 = vmul.f32 %v1057, %v1059
  %v1061 = vadd.f32 %v1057, %v1060
  %vm1062 = vweird.f32 %v934
  %vm1063 = vweird.f32 %v1057
  %vm1064 = vmor %vm1062, %vm1063
  %v1065 = vsel %vm1064, %v1057, %v1061
  %v1066 = vand.u32 2147483647, %v934
  %vm1067 = vcmp.eq.f32.partialorder %v1066, 8.507059e+37
  %v1068 = vand.u32 %v934, 2147483648
  %v1069 = vor.u32 1.1754944e-38, %v1068
  %v1070 = vsel %vm1067, %v1069, %v1065
  %v1071 = vrcp.pop %v936
  %v1072 = vmul.f32 %v936, %v1071
  %v1073 = vsub.f32 1.0, %v1072
  %v1074 = vmul.f32 %v1071, %v1073
  %v1075 = vadd.f32 %v1071, %v1074
  %vm1076 = vweird.f32 %v936
  %vm1077 = vweird.f32 %v1071
  %vm1078 = vmor %vm1076, %vm1077
  %v1079 = vsel %vm1078, %v1071, %v1075
  %v1080 = vand.u32 2147483647, %v936
  %vm1081 = vcmp.eq.f32.partialorder %v1080, 8.507059e+37
  %v1082 = vand.u32 %v936, 2147483648
  %v1083 = vor.u32 1.1754944e-38, %v1082
  %v1084 = vsel %vm1081, %v1083, %v1079
  %v1085 = vrcp.pop %v938
  %v1086 = vmul.f32 %v938, %v1085
  %v1087 = vsub.f32 1.0, %v1086
  %v1088 = vmul.f32 %v1085, %v1087
  %v1089 = vadd.f32 %v1085, %v1088
  %vm1090 = vweird.f32 %v938
  %vm1091 = vweird.f32 %v1085
  %vm1092 = vmor %vm1090, %vm1091
  %v1093 = vsel %vm1092, %v1085, %v1089
  %v1094 = vand.u32 2147483647, %v938
  %vm1095 = vcmp.eq.f32.partialorder %v1094, 8.507059e+37
  %v1096 = vand.u32 %v938, 2147483648
  %v1097 = vor.u32 1.1754944e-38, %v1096
  %v1098 = vsel %vm1095, %v1097, %v1093
  %v1099 = vrcp.pop %v940
  %v1100 = vmul.f32 %v940, %v1099
  %v1101 = vsub.f32 1.0, %v1100
  %v1102 = vmul.f32 %v1099, %v1101
  %v1103 = vadd.f32 %v1099, %v1102
  %vm1104 = vweird.f32 %v940
  %vm1105 = vweird.f32 %v1099
  %vm1106 = vmor %vm1104, %vm1105
  %v1107 = vsel %vm1106, %v1099, %v1103
  %v1108 = vand.u32 2147483647, %v940
  %vm1109 = vcmp.eq.f32.partialorder %v1108, 8.507059e+37
  %v1110 = vand.u32 %v940, 2147483648
  %v1111 = vor.u32 1.1754944e-38, %v1110
  %v1112 = vsel %vm1109, %v1111, %v1107
  %v1113 = vrcp.pop %v942
  %v1114 = vmul.f32 %v942, %v1113
  %v1115 = vsub.f32 1.0, %v1114
  %v1116 = vmul.f32 %v1113, %v1115
  %v1117 = vadd.f32 %v1113, %v1116
  %vm1118 = vweird.f32 %v942
  %vm1119 = vweird.f32 %v1113
  %vm1120 = vmor %vm1118, %vm1119
  %v1121 = vsel %vm1120, %v1113, %v1117
  %v1122 = vand.u32 2147483647, %v942
  %vm1123 = vcmp.eq.f32.partialorder %v1122, 8.507059e+37
  %v1124 = vand.u32 %v942, 2147483648
  %v1125 = vor.u32 1.1754944e-38, %v1124
  %v1126 = vsel %vm1123, %v1125, %v1121
  %v1127 = vrcp.pop %v944
  %v1128 = vmul.f32 %v944, %v1127
  %v1129 = vsub.f32 1.0, %v1128
  %v1130 = vmul.f32 %v1127, %v1129
  %v1131 = vadd.f32 %v1127, %v1130
  %vm1132 = vweird.f32 %v944
  %vm1133 = vweird.f32 %v1127
  %vm1134 = vmor %vm1132, %vm1133
  %v1135 = vsel %vm1134, %v1127, %v1131
  %v1136 = vand.u32 2147483647, %v944
  %vm1137 = vcmp.eq.f32.partialorder %v1136, 8.507059e+37
  %v1138 = vand.u32 %v944, 2147483648
  %v1139 = vor.u32 1.1754944e-38, %v1138
  %v1140 = vsel %vm1137, %v1139, %v1135
  %v1141 = vrcp.pop %v946
  %v1142 = vmul.f32 %v946, %v1141
  %v1143 = vsub.f32 1.0, %v1142
  %v1144 = vmul.f32 %v1141, %v1143
  %v1145 = vadd.f32 %v1141, %v1144
  %vm1146 = vweird.f32 %v946
  %vm1147 = vweird.f32 %v1141
  %vm1148 = vmor %vm1146, %vm1147
  %v1149 = vsel %vm1148, %v1141, %v1145
  %v1150 = vand.u32 2147483647, %v946
  %vm1151 = vcmp.eq.f32.partialorder %v1150, 8.507059e+37
  %v1152 = vand.u32 %v946, 2147483648
  %v1153 = vor.u32 1.1754944e-38, %v1152
  %v1154 = vsel %vm1151, %v1153, %v1149
  %v1155 = vrcp.pop %v948
  %v1156 = vmul.f32 %v948, %v1155
  %v1157 = vsub.f32 1.0, %v1156
  %v1158 = vmul.f32 %v1155, %v1157
  %v1159 = vadd.f32 %v1155, %v1158
  %vm1160 = vweird.f32 %v948
  %vm1161 = vweird.f32 %v1155
  %vm1162 = vmor %vm1160, %vm1161
  %v1163 = vsel %vm1162, %v1155, %v1159
  %v1164 = vand.u32 2147483647, %v948
  %vm1165 = vcmp.eq.f32.partialorder %v1164, 8.507059e+37
  %v1166 = vand.u32 %v948, 2147483648
  %v1167 = vor.u32 1.1754944e-38, %v1166
  %v1168 = vsel %vm1165, %v1167, %v1163
  %v1169 = vrcp.pop %v950
  %v1170 = vmul.f32 %v950, %v1169
  %v1171 = vsub.f32 1.0, %v1170
  %v1172 = vmul.f32 %v1169, %v1171
  %v1173 = vadd.f32 %v1169, %v1172
  %vm1174 = vweird.f32 %v950
  %vm1175 = vweird.f32 %v1169
  %vm1176 = vmor %vm1174, %vm1175
  %v1177 = vsel %vm1176, %v1169, %v1173
  %v1178 = vand.u32 2147483647, %v950
  %vm1179 = vcmp.eq.f32.partialorder %v1178, 8.507059e+37
  %v1180 = vand.u32 %v950, 2147483648
  %v1181 = vor.u32 1.1754944e-38, %v1180
  %v1182 = vsel %vm1179, %v1181, %v1177
  %v1183 = vrcp.pop %v952
  %v1184 = vmul.f32 %v952, %v1183
  %v1185 = vsub.f32 1.0, %v1184
  %v1186 = vmul.f32 %v1183, %v1185
  %v1187 = vadd.f32 %v1183, %v1186
  %vm1188 = vweird.f32 %v952
  %vm1189 = vweird.f32 %v1183
  %vm1190 = vmor %vm1188, %vm1189
  %v1191 = vsel %vm1190, %v1183, %v1187
  %v1192 = vand.u32 2147483647, %v952
  %vm1193 = vcmp.eq.f32.partialorder %v1192, 8.507059e+37
  %v1194 = vand.u32 %v952, 2147483648
  %v1195 = vor.u32 1.1754944e-38, %v1194
  %v1196 = vsel %vm1193, %v1195, %v1191
  %v1197 = vrcp.pop %v954
  %v1198 = vmul.f32 %v954, %v1197
  %v1199 = vsub.f32 1.0, %v1198
  %v1200 = vmul.f32 %v1197, %v1199
  %v1201 = vadd.f32 %v1197, %v1200
  %vm1202 = vweird.f32 %v954
  %vm1203 = vweird.f32 %v1197
  %vm1204 = vmor %vm1202, %vm1203
  %v1205 = vsel %vm1204, %v1197, %v1201
  %v1206 = vand.u32 2147483647, %v954
  %vm1207 = vcmp.eq.f32.partialorder %v1206, 8.507059e+37
  %v1208 = vand.u32 %v954, 2147483648
  %v1209 = vor.u32 1.1754944e-38, %v1208
  %v1210 = vsel %vm1207, %v1209, %v1205
  %v1211 = vrcp.pop %v956
  %v1212 = vmul.f32 %v956, %v1211
  %v1213 = vsub.f32 1.0, %v1212
  %v1214 = vmul.f32 %v1211, %v1213
  %v1215 = vadd.f32 %v1211, %v1214
  %vm1216 = vweird.f32 %v956
  %vm1217 = vweird.f32 %v1211
  %vm1218 = vmor %vm1216, %vm1217
  %v1219 = vsel %vm1218, %v1211, %v1215
  %v1220 = vand.u32 2147483647, %v956
  %vm1221 = vcmp.eq.f32.partialorder %v1220, 8.507059e+37
  %v1222 = vand.u32 %v956, 2147483648
  %v1223 = vor.u32 1.1754944e-38, %v1222
  %v1224 = vsel %vm1221, %v1223, %v1219
  %v1225 = vrcp.pop %v958
  %v1226 = vmul.f32 %v958, %v1225
  %v1227 = vsub.f32 1.0, %v1226
  %v1228 = vmul.f32 %v1225, %v1227
  %v1229 = vadd.f32 %v1225, %v1228
  %vm1230 = vweird.f32 %v958
  %vm1231 = vweird.f32 %v1225
  %vm1232 = vmor %vm1230, %vm1231
  %v1233 = vsel %vm1232, %v1225, %v1229
  %v1234 = vand.u32 2147483647, %v958
  %vm1235 = vcmp.eq.f32.partialorder %v1234, 8.507059e+37
  %v1236 = vand.u32 %v958, 2147483648
  %v1237 = vor.u32 1.1754944e-38, %v1236
  %v1238 = vsel %vm1235, %v1237, %v1233
  %v1239 = vrcp.pop %v960
  %v1240 = vmul.f32 %v960, %v1239
  %v1241 = vsub.f32 1.0, %v1240
  %v1242 = vmul.f32 %v1239, %v1241
  %v1243 = vadd.f32 %v1239, %v1242
  %vm1244 = vweird.f32 %v960
  %vm1245 = vweird.f32 %v1239
  %vm1246 = vmor %vm1244, %vm1245
  %v1247 = vsel %vm1246, %v1239, %v1243
  %v1248 = vand.u32 2147483647, %v960
  %vm1249 = vcmp.eq.f32.partialorder %v1248, 8.507059e+37
  %v1250 = vand.u32 %v960, 2147483648
  %v1251 = vor.u32 1.1754944e-38, %v1250
  %v1252 = vsel %vm1249, %v1251, %v1247
  %v1253 = vrcp.pop %v962
  %v1254 = vmul.f32 %v962, %v1253
  %v1255 = vsub.f32 1.0, %v1254
  %v1256 = vmul.f32 %v1253, %v1255
  %v1257 = vadd.f32 %v1253, %v1256
  %vm1258 = vweird.f32 %v962
  %vm1259 = vweird.f32 %v1253
  %vm1260 = vmor %vm1258, %vm1259
  %v1261 = vsel %vm1260, %v1253, %v1257
  %v1262 = vand.u32 2147483647, %v962
  %vm1263 = vcmp.eq.f32.partialorder %v1262, 8.507059e+37
  %v1264 = vand.u32 %v962, 2147483648
  %v1265 = vor.u32 1.1754944e-38, %v1264
  %v1266 = vsel %vm1263, %v1265, %v1261
  %v1267 = vrcp.pop %v964
  %v1268 = vmul.f32 %v964, %v1267
  %v1269 = vsub.f32 1.0, %v1268
  %v1270 = vmul.f32 %v1267, %v1269
  %v1271 = vadd.f32 %v1267, %v1270
  %vm1272 = vweird.f32 %v964
  %vm1273 = vweird.f32 %v1267
  %vm1274 = vmor %vm1272, %vm1273
  %v1275 = vsel %vm1274, %v1267, %v1271
  %v1276 = vand.u32 2147483647, %v964
  %vm1277 = vcmp.eq.f32.partialorder %v1276, 8.507059e+37
  %v1278 = vand.u32 %v964, 2147483648
  %v1279 = vor.u32 1.1754944e-38, %v1278
  %v1280 = vsel %vm1277, %v1279, %v1275
  %v1281 = vrcp.pop %v966
  %v1282 = vmul.f32 %v966, %v1281
  %v1283 = vsub.f32 1.0, %v1282
  %v1284 = vmul.f32 %v1281, %v1283
  %v1285 = vadd.f32 %v1281, %v1284
  %vm1286 = vweird.f32 %v966
  %vm1287 = vweird.f32 %v1281
  %vm1288 = vmor %vm1286, %vm1287
  %v1289 = vsel %vm1288, %v1281, %v1285
  %v1290 = vand.u32 2147483647, %v966
  %vm1291 = vcmp.eq.f32.partialorder %v1290, 8.507059e+37
  %v1292 = vand.u32 %v966, 2147483648
  %v1293 = vor.u32 1.1754944e-38, %v1292
  %v1294 = vsel %vm1291, %v1293, %v1289
  %v1295 = vrcp.pop %v968
  %v1296 = vmul.f32 %v968, %v1295
  %v1297 = vsub.f32 1.0, %v1296
  %v1298 = vmul.f32 %v1295, %v1297
  %v1299 = vadd.f32 %v1295, %v1298
  %vm1300 = vweird.f32 %v968
  %vm1301 = vweird.f32 %v1295
  %vm1302 = vmor %vm1300, %vm1301
  %v1303 = vsel %vm1302, %v1295, %v1299
  %v1304 = vand.u32 2147483647, %v968
  %vm1305 = vcmp.eq.f32.partialorder %v1304, 8.507059e+37
  %v1306 = vand.u32 %v968, 2147483648
  %v1307 = vor.u32 1.1754944e-38, %v1306
  %v1308 = vsel %vm1305, %v1307, %v1303
  %v1309 = vrcp.pop %v970
  %v1310 = vmul.f32 %v970, %v1309
  %v1311 = vsub.f32 1.0, %v1310
  %v1312 = vmul.f32 %v1309, %v1311
  %v1313 = vadd.f32 %v1309, %v1312
  %vm1314 = vweird.f32 %v970
  %vm1315 = vweird.f32 %v1309
  %vm1316 = vmor %vm1314, %vm1315
  %v1317 = vsel %vm1316, %v1309, %v1313
  %v1318 = vand.u32 2147483647, %v970
  %vm1319 = vcmp.eq.f32.partialorder %v1318, 8.507059e+37
  %v1320 = vand.u32 %v970, 2147483648
  %v1321 = vor.u32 1.1754944e-38, %v1320
  %v1322 = vsel %vm1319, %v1321, %v1317
  %v1323 = vrcp.pop %v972
  %v1324 = vmul.f32 %v972, %v1323
  %v1325 = vsub.f32 1.0, %v1324
  %v1326 = vmul.f32 %v1323, %v1325
  %v1327 = vadd.f32 %v1323, %v1326
  %vm1328 = vweird.f32 %v972
  %vm1329 = vweird.f32 %v1323
  %vm1330 = vmor %vm1328, %vm1329
  %v1331 = vsel %vm1330, %v1323, %v1327
  %v1332 = vand.u32 2147483647, %v972
  %vm1333 = vcmp.eq.f32.partialorder %v1332, 8.507059e+37
  %v1334 = vand.u32 %v972, 2147483648
  %v1335 = vor.u32 1.1754944e-38, %v1334
  %v1336 = vsel %vm1333, %v1335, %v1331
  %v1337 = vrcp.pop %v974
  %v1338 = vmul.f32 %v974, %v1337
  %v1339 = vsub.f32 1.0, %v1338
  %v1340 = vmul.f32 %v1337, %v1339
  %v1341 = vadd.f32 %v1337, %v1340
  %vm1342 = vweird.f32 %v974
  %vm1343 = vweird.f32 %v1337
  %vm1344 = vmor %vm1342, %vm1343
  %v1345 = vsel %vm1344, %v1337, %v1341
  %v1346 = vand.u32 2147483647, %v974
  %vm1347 = vcmp.eq.f32.partialorder %v1346, 8.507059e+37
  %v1348 = vand.u32 %v974, 2147483648
  %v1349 = vor.u32 1.1754944e-38, %v1348
  %v1350 = vsel %vm1347, %v1349, %v1345
  %v1351 = vrcp.pop %v976
  %v1352 = vmul.f32 %v976, %v1351
  %v1353 = vsub.f32 1.0, %v1352
  %v1354 = vmul.f32 %v1351, %v1353
  %v1355 = vadd.f32 %v1351, %v1354
  %vm1356 = vweird.f32 %v976
  %vm1357 = vweird.f32 %v1351
  %vm1358 = vmor %vm1356, %vm1357
  %v1359 = vsel %vm1358, %v1351, %v1355
  %v1360 = vand.u32 2147483647, %v976
  %vm1361 = vcmp.eq.f32.partialorder %v1360, 8.507059e+37
  %v1362 = vand.u32 %v976, 2147483648
  %v1363 = vor.u32 1.1754944e-38, %v1362
  %v1364 = vsel %vm1361, %v1363, %v1359
  %v1365 = vrcp.pop %v978
  %v1366 = vmul.f32 %v978, %v1365
  %v1367 = vsub.f32 1.0, %v1366
  %v1368 = vmul.f32 %v1365, %v1367
  %v1369 = vadd.f32 %v1365, %v1368
  %vm1370 = vweird.f32 %v978
  %vm1371 = vweird.f32 %v1365
  %vm1372 = vmor %vm1370, %vm1371
  %v1373 = vsel %vm1372, %v1365, %v1369
  %v1374 = vand.u32 2147483647, %v978
  %vm1375 = vcmp.eq.f32.partialorder %v1374, 8.507059e+37
  %v1376 = vand.u32 %v978, 2147483648
  %v1377 = vor.u32 1.1754944e-38, %v1376
  %v1378 = vsel %vm1375, %v1377, %v1373
  %v1379 = vrcp.pop %v980
  %v1380 = vmul.f32 %v980, %v1379
  %v1381 = vsub.f32 1.0, %v1380
  %v1382 = vmul.f32 %v1379, %v1381
  %v1383 = vadd.f32 %v1379, %v1382
  %vm1384 = vweird.f32 %v980
  %vm1385 = vweird.f32 %v1379
  %vm1386 = vmor %vm1384, %vm1385
  %v1387 = vsel %vm1386, %v1379, %v1383
  %v1388 = vand.u32 2147483647, %v980
  %vm1389 = vcmp.eq.f32.partialorder %v1388, 8.507059e+37
  %v1390 = vand.u32 %v980, 2147483648
  %v1391 = vor.u32 1.1754944e-38, %v1390
  %v1392 = vsel %vm1389, %v1391, %v1387
  %v1393 = vrcp.pop %v982
  %v1394 = vmul.f32 %v982, %v1393
  %v1395 = vsub.f32 1.0, %v1394
  %v1396 = vmul.f32 %v1393, %v1395
  %v1397 = vadd.f32 %v1393, %v1396
  %vm1398 = vweird.f32 %v982
  %vm1399 = vweird.f32 %v1393
  %vm1400 = vmor %vm1398, %vm1399
  %v1401 = vsel %vm1400, %v1393, %v1397
  %v1402 = vand.u32 2147483647, %v982
  %vm1403 = vcmp.eq.f32.partialorder %v1402, 8.507059e+37
  %v1404 = vand.u32 %v982, 2147483648
  %v1405 = vor.u32 1.1754944e-38, %v1404
  %v1406 = vsel %vm1403, %v1405, %v1401
  %v1407 = vrcp.pop %v984
  %v1408 = vmul.f32 %v984, %v1407
  %v1409 = vsub.f32 1.0, %v1408
  %v1410 = vmul.f32 %v1407, %v1409
  %v1411 = vadd.f32 %v1407, %v1410
  %vm1412 = vweird.f32 %v984
  %vm1413 = vweird.f32 %v1407
  %vm1414 = vmor %vm1412, %vm1413
  %v1415 = vsel %vm1414, %v1407, %v1411
  %v1416 = vand.u32 2147483647, %v984
  %vm1417 = vcmp.eq.f32.partialorder %v1416, 8.507059e+37
  %v1418 = vand.u32 %v984, 2147483648
  %v1419 = vor.u32 1.1754944e-38, %v1418
  %v1420 = vsel %vm1417, %v1419, %v1415
  %v1421 = vrcp.pop %v986
  %v1422 = vmul.f32 %v986, %v1421
  %v1423 = vsub.f32 1.0, %v1422
  %v1424 = vmul.f32 %v1421, %v1423
  %v1425 = vadd.f32 %v1421, %v1424
  %vm1426 = vweird.f32 %v986
  %vm1427 = vweird.f32 %v1421
  %vm1428 = vmor %vm1426, %vm1427
  %v1429 = vsel %vm1428, %v1421, %v1425
  %v1430 = vand.u32 2147483647, %v986
  %vm1431 = vcmp.eq.f32.partialorder %v1430, 8.507059e+37
  %v1432 = vand.u32 %v986, 2147483648
  %v1433 = vor.u32 1.1754944e-38, %v1432
  %v1434 = vsel %vm1431, %v1433, %v1429
  %v1435 = vrcp.pop %v988
  %v1436 = vmul.f32 %v988, %v1435
  %v1437 = vsub.f32 1.0, %v1436
  %v1438 = vmul.f32 %v1435, %v1437
  %v1439 = vadd.f32 %v1435, %v1438
  %vm1440 = vweird.f32 %v988
  %vm1441 = vweird.f32 %v1435
  %vm1442 = vmor %vm1440, %vm1441
  %v1443 = vsel %vm1442, %v1435, %v1439
  %v1444 = vand.u32 2147483647, %v988
  %vm1445 = vcmp.eq.f32.partialorder %v1444, 8.507059e+37
  %v1446 = vand.u32 %v988, 2147483648
  %v1447 = vor.u32 1.1754944e-38, %v1446
  %v1448 = vsel %vm1445, %v1447, %v1443
  %v1449 = vrcp.pop %v990
  %v1450 = vmul.f32 %v990, %v1449
  %v1451 = vsub.f32 1.0, %v1450
  %v1452 = vmul.f32 %v1449, %v1451
  %v1453 = vadd.f32 %v1449, %v1452
  %vm1454 = vweird.f32 %v990
  %vm1455 = vweird.f32 %v1449
  %vm1456 = vmor %vm1454, %vm1455
  %v1457 = vsel %vm1456, %v1449, %v1453
  %v1458 = vand.u32 2147483647, %v990
  %vm1459 = vcmp.eq.f32.partialorder %v1458, 8.507059e+37
  %v1460 = vand.u32 %v990, 2147483648
  %v1461 = vor.u32 1.1754944e-38, %v1460
  %v1462 = vsel %vm1459, %v1461, %v1457
  %v1463 = vrcp.pop %v992
  %v1464 = vmul.f32 %v992, %v1463
  %v1465 = vsub.f32 1.0, %v1464
  %v1466 = vmul.f32 %v1463, %v1465
  %v1467 = vadd.f32 %v1463, %v1466
  %vm1468 = vweird.f32 %v992
  %vm1469 = vweird.f32 %v1463
  %vm1470 = vmor %vm1468, %vm1469
  %v1471 = vsel %vm1470, %v1463, %v1467
  %v1472 = vand.u32 2147483647, %v992
  %vm1473 = vcmp.eq.f32.partialorder %v1472, 8.507059e+37
  %v1474 = vand.u32 %v992, 2147483648
  %v1475 = vor.u32 1.1754944e-38, %v1474
  %v1476 = vsel %vm1473, %v1475, %v1471
  %v1477 = vrcp.pop %v994
  %v1478 = vmul.f32 %v994, %v1477
  %v1479 = vsub.f32 1.0, %v1478
  %v1480 = vmul.f32 %v1477, %v1479
  %v1481 = vadd.f32 %v1477, %v1480
  %vm1482 = vweird.f32 %v994
  %vm1483 = vweird.f32 %v1477
  %vm1484 = vmor %vm1482, %vm1483
  %v1485 = vsel %vm1484, %v1477, %v1481
  %v1486 = vand.u32 2147483647, %v994
  %vm1487 = vcmp.eq.f32.partialorder %v1486, 8.507059e+37
  %v1488 = vand.u32 %v994, 2147483648
  %v1489 = vor.u32 1.1754944e-38, %v1488
  %v1490 = vsel %vm1487, %v1489, %v1485
  %v1491 = vrcp.pop %v996
  %v1492 = vmul.f32 %v996, %v1491
  %v1493 = vsub.f32 1.0, %v1492
  %v1494 = vmul.f32 %v1491, %v1493
  %v1495 = vadd.f32 %v1491, %v1494
  %vm1496 = vweird.f32 %v996
  %vm1497 = vweird.f32 %v1491
  %vm1498 = vmor %vm1496, %vm1497
  %v1499 = vsel %vm1498, %v1491, %v1495
  %v1500 = vand.u32 2147483647, %v996
  %vm1501 = vcmp.eq.f32.partialorder %v1500, 8.507059e+37
  %v1502 = vand.u32 %v996, 2147483648
  %v1503 = vor.u32 1.1754944e-38, %v1502
  %v1504 = vsel %vm1501, %v1503, %v1499
  %v1505 = vrcp.pop %v998
  %v1506 = vmul.f32 %v998, %v1505
  %v1507 = vsub.f32 1.0, %v1506
  %v1508 = vmul.f32 %v1505, %v1507
  %v1509 = vadd.f32 %v1505, %v1508
  %vm1510 = vweird.f32 %v998
  %vm1511 = vweird.f32 %v1505
  %vm1512 = vmor %vm1510, %vm1511
  %v1513 = vsel %vm1512, %v1505, %v1509
  %v1514 = vand.u32 2147483647, %v998
  %vm1515 = vcmp.eq.f32.partialorder %v1514, 8.507059e+37
  %v1516 = vand.u32 %v998, 2147483648
  %v1517 = vor.u32 1.1754944e-38, %v1516
  %v1518 = vsel %vm1515, %v1517, %v1513
  %v1519 = vrcp.pop %v1000
  %v1520 = vmul.f32 %v1000, %v1519
  %v1521 = vsub.f32 1.0, %v1520
  %v1522 = vmul.f32 %v1519, %v1521
  %v1523 = vadd.f32 %v1519, %v1522
  %vm1524 = vweird.f32 %v1000
  %vm1525 = vweird.f32 %v1519
  %vm1526 = vmor %vm1524, %vm1525
  %v1527 = vsel %vm1526, %v1519, %v1523
  %v1528 = vand.u32 2147483647, %v1000
  %vm1529 = vcmp.eq.f32.partialorder %v1528, 8.507059e+37
  %v1530 = vand.u32 %v1000, 2147483648
  %v1531 = vor.u32 1.1754944e-38, %v1530
  %v1532 = vsel %vm1529, %v1531, %v1527
  %v1533 = vmul.f32 %v850, %v1014
  %v1534 = vmul.f32 %v852, %v1028
  %v1535 = vmul.f32 %v854, %v1042
  %v1536 = vmul.f32 %v856, %v1056
  %v1537 = vmul.f32 %v858, %v1070
  %v1538 = vmul.f32 %v860, %v1084
  %v1539 = vmul.f32 %v862, %v1098
  %v1540 = vmul.f32 %v864, %v1112
  %v1541 = vmul.f32 %v866, %v1126
  %v1542 = vmul.f32 %v868, %v1140
  %v1543 = vmul.f32 %v870, %v1154
  %v1544 = vmul.f32 %v872, %v1168
  %v1545 = vmul.f32 %v874, %v1182
  %v1546 = vmul.f32 %v876, %v1196
  %v1547 = vmul.f32 %v878, %v1210
  %v1548 = vmul.f32 %v880, %v1224
  %v1549 = vmul.f32 %v882, %v1238
  %v1550 = vmul.f32 %v884, %v1252
  %v1551 = vmul.f32 %v886, %v1266
  %v1552 = vmul.f32 %v888, %v1280
  %v1553 = vmul.f32 %v890, %v1294
  %v1554 = vmul.f32 %v892, %v1308
  %v1555 = vmul.f32 %v894, %v1322
  %v1556 = vmul.f32 %v896, %v1336
  %v1557 = vmul.f32 %v898, %v1350
  %v1558 = vmul.f32 %v900, %v1364
  %v1559 = vmul.f32 %v902, %v1378
  %v1560 = vmul.f32 %v904, %v1392
  %v1561 = vmul.f32 %v906, %v1406
  %v1562 = vmul.f32 %v908, %v1420
  %v1563 = vmul.f32 %v910, %v1434
  %v1564 = vmul.f32 %v912, %v1448
  %v1565 = vmul.f32 %v914, %v1462
  %v1566 = vmul.f32 %v916, %v1476
  %v1567 = vmul.f32 %v918, %v1490
  %v1568 = vmul.f32 %v920, %v1504
  %v1569 = vmul.f32 %v922, %v1518
  %v1570 = vmul.f32 %v924, %v1532
  %1571 = vst [vmem:[%s3] sm:$0xff] %v1533
  %1572 = vst [vmem:[%s3 + $0x8] sm:$0xff] %v1534
  %1573 = vst [vmem:[%s3 + $0x10] sm:$0xff] %v1535
  %1574 = vst [vmem:[%s3 + $0x18] sm:$0xff] %v1536
  %1575 = vst [vmem:[%s3 + $0x20] sm:$0xff] %v1537
  %1576 = vst [vmem:[%s3 + $0x28] sm:$0xff] %v1538
  %1577 = vst [vmem:[%s3 + $0x30] sm:$0xff] %v1539
  %1578 = vst [vmem:[%s3 + $0x38] sm:$0xff] %v1540
  %1579 = vst [vmem:[%s3 + $0x40] sm:$0xff] %v1541
  %1580 = vst [vmem:[%s3 + $0x48] sm:$0xff] %v1542
  %1581 = vst [vmem:[%s3 + $0x50] sm:$0xff] %v1543
  %1582 = vst [vmem:[%s3 + $0x58] sm:$0xff] %v1544
  %1583 = vst [vmem:[%s3 + $0x60] sm:$0xff] %v1545
  %1584 = vst [vmem:[%s3 + $0x68] sm:$0xff] %v1546
  %1585 = vst [vmem:[%s3 + $0x70] sm:$0xff] %v1547
  %1586 = vst [vmem:[%s3 + $0x78] sm:$0xff] %v1548
  %1587 = vst [vmem:[%s3 + $0x80] sm:$0xff] %v1549
  %1588 = vst [vmem:[%s3 + $0x88] sm:$0xff] %v1550
  %1589 = vst [vmem:[%s3 + $0x90] sm:$0xff] %v1551
  %1590 = vst [vmem:[%s3 + $0x98] sm:$0xff] %v1552
  %1591 = vst [vmem:[%s3 + $0xa0] sm:$0xff] %v1553
  %1592 = vst [vmem:[%s3 + $0xa8] sm:$0xff] %v1554
  %1593 = vst [vmem:[%s3 + $0xb0] sm:$0xff] %v1555
  %1594 = vst [vmem:[%s3 + $0xb8] sm:$0xff] %v1556
  %1595 = vst [vmem:[%s3 + $0xc0] sm:$0xff] %v1557
  %1596 = vst [vmem:[%s3 + $0xc8] sm:$0xff] %v1558
  %1597 = vst [vmem:[%s3 + $0xd0] sm:$0xff] %v1559
  %1598 = vst [vmem:[%s3 + $0xd8] sm:$0xff] %v1560
  %1599 = vst [vmem:[%s3 + $0xe0] sm:$0xff] %v1561
  %1600 = vst [vmem:[%s3 + $0xe8] sm:$0xff] %v1562
  %1601 = vst [vmem:[%s3 + $0xf0] sm:$0xff] %v1563
  %1602 = vst [vmem:[%s3 + $0xf8] sm:$0xff] %v1564
  %1603 = vst [vmem:[%s3 + $0x100] sm:$0xff] %v1565
  %1604 = vst [vmem:[%s3 + $0x108] sm:$0xff] %v1566
  %1605 = vst [vmem:[%s3 + $0x110] sm:$0xff] %v1567
  %1606 = vst [vmem:[%s3 + $0x118] sm:$0xff] %v1568
  %1607 = vst [vmem:[%s3 + $0x120] sm:$0xff] %v1569
  %1608 = vst [vmem:[%s3 + $0x128] sm:$0xff] %v1570
  // Predicated region
  $region14: #{function_approximator_forward.1} parent=0 // pred_check
    _
  $region15: #{function_approximator_forward.1} parent=0 // pred_check_branch
    %1610 = sbr.rel (0) target = $region17
  $region16: #{function_approximator_forward.1} parent=0 // pred_region
    _
  $region17: #{function_approximator_forward.1} parent=0 // pred_fallthru
    _
  // Predicated region
  $region18: #{function_approximator_forward.1} parent=0 // pred_check
    _
  $region19: #{function_approximator_forward.1} parent=0 // pred_check_branch
    %1612 = sbr.rel (0) target = $region21
  $region20: #{function_approximator_forward.1} parent=0 // pred_region
    _
  $region21: #{function_approximator_forward.1} parent=0 // pred_fallthru
    _

</llo_original>
